<compile_context>
chip_gen: v6e
topology: v6e:2x2x1
jax: 0.10.0
libtpu: 0.0.40
codegen_flags: <defaults>
</compile_context>

<pallas_src>
import functools

import jax
import jax.numpy as jnp
from jax.experimental import pallas as pl
from jax.experimental.pallas import tpu as pltpu

_LANE = 128
_SUBLANE = 8


def _round_up(x, m):
    return ((x + m - 1) // m) * m


# --------------------------------------------------------------------------
# Kernel
# --------------------------------------------------------------------------
def _make_fused_kernel(num_layers, num_modalities, hc, aligned):
    """Fused kernel for a static number of encoder layers.

    Ref order per grid step (batch tile):
      x_ref                      (tb, F)       input batch tile (f32)
      per layer l: w_ref[l]      layer-0: (F, Hp); later layers:
                                 aligned -> (M, Hc, Hc) stack, else (Hp, Hp)
                   a_ref[l]      (8, Hp) f32, rows = [bias; scale; shift; 0...]
                                 (scale/shift only meaningful on the last layer)
      o_ref                      (tb, Hp) f32 concatenated lane-padded encodings
    """

    def kernel(x_ref, *refs):
        o_ref = refs[-1]
        h = x_ref[...]
        for l in range(num_layers):                      # statically unrolled
            w_ref = refs[2 * l]
            a_ref = refs[2 * l + 1]
            a = a_ref[...]                               # (8, Hp) f32
            hb = h.astype(w_ref.dtype)                   # bf16 for the MXU
            if l == 0 or not aligned:
                h = jnp.dot(hb, w_ref[...],
                            preferred_element_type=jnp.float32)
            else:
                # Per-modality GEMMs on 128-lane-aligned column groups.
                parts = []
                for m in range(num_modalities):
                    parts.append(
                        jnp.dot(hb[:, m * hc:(m + 1) * hc], w_ref[m],
                                preferred_element_type=jnp.float32))
                h = jnp.concatenate(parts, axis=1)
            # Linear bias (with the previous layer's BN folded in) + ReLU.
            h = jnp.maximum(h + a[0:1, :], 0.0)
            # Dropout: eval mode -> identity.
            if l == num_layers - 1:
                # Only the last layer keeps an explicit BatchNorm affine.
                h = h * a[1:2, :] + a[2:3, :]
        o_ref[...] = h.astype(o_ref.dtype)

    return kernel


# --------------------------------------------------------------------------
# One-time parameter preparation (BN fold, bf16 cast, block layout)
# --------------------------------------------------------------------------
def prepare_fused_params(blocks, params, num_features, hidden_size, eps=1e-5,
                         compute_dtype=jnp.bfloat16):
    """Fold BN, fold intermediate BN affines into the next Linear, build the
    block-structured weights, cast weights to `compute_dtype`.

    Returns (layers, meta); layers[l] = (w_full, affine) with
      layer 0 : w_full (F, Hp)          (x[:, modality] gather folded into rows)
      layer>0 : aligned -> (M, Hc, Hc) stack; tiny-H -> (Hp, Hp) block-diagonal
      affine  : (8, Hp) f32, rows [bias; scale; shift; zeros] — padded lanes
                carry (bias=0, scale=1, shift=0) so they stay exactly zero.
    """
    M = len(blocks)
    L = len(params[0])
    H = hidden_size
    aligned = H >= _LANE
    Hc = _round_up(H, _LANE) if aligned else H
    Hp = M * Hc if aligned else _round_up(M * H, _LANE)

    # Per-modality: BN eval-mode affine + fold BN_l into Linear_{l+1}.
    eff = []
    for m in range(M):
        plist = params[m]
        scales, shifts = [], []
        for p in plist:
            sc = p["gamma"].astype(jnp.float32) / jnp.sqrt(
                p["running_var"].astype(jnp.float32) + eps)
            sh = p["beta"].astype(jnp.float32) - p["running_mean"].astype(
                jnp.float32) * sc
            scales.append(sc)
            shifts.append(sh)
        ws, bs = [], []
        for l, p in enumerate(plist):
            w = p["w"].astype(jnp.float32)
            b = p["b"].astype(jnp.float32)
            if l > 0:
                # Exact: (z*scale + shift) @ W = z @ (diag(scale) W) + shift @ W
                w = scales[l - 1][:, None] * w
                b = b + shifts[l - 1] @ p["w"].astype(jnp.float32)
            ws.append(w)
            bs.append(b)
        eff.append({"w": ws, "b": bs, "scale": scales[-1], "shift": shifts[-1]})

    layers = []
    for l in range(L):
        bias = jnp.zeros((Hp,), jnp.float32)
        scale = jnp.ones((Hp,), jnp.float32)
        shift = jnp.zeros((Hp,), jnp.float32)
        if l == 0:
            w_full = jnp.zeros((num_features, Hp), jnp.float32)
        elif aligned:
            w_full = jnp.zeros((M, Hc, Hc), jnp.float32)
        else:
            w_full = jnp.zeros((Hp, Hp), jnp.float32)
        for m, cols in enumerate(blocks):
            c0 = m * Hc
            wm = eff[m]["w"][l]
            bias = bias.at[c0:c0 + H].set(eff[m]["b"][l])
            if l == L - 1:
                scale = scale.at[c0:c0 + H].set(eff[m]["scale"])
                shift = shift.at[c0:c0 + H].set(eff[m]["shift"])
            if l == 0:
                rows = jnp.asarray(cols, dtype=jnp.int32)
                w_full = w_full.at[rows, c0:c0 + H].set(wm)
            elif aligned:
                w_full = w_full.at[m, :H, :H].set(wm)
            else:
                w_full = w_full.at[c0:c0 + H, c0:c0 + H].set(wm)
        affine = jnp.zeros((_SUBLANE, Hp), jnp.float32)
        affine = affine.at[0].set(bias).at[1].set(scale).at[2].set(shift)
        layers.append((w_full.astype(compute_dtype), affine))

    meta = {"num_modalities": M, "num_layers": L, "hidden_size": H,
            "Hc": Hc, "Hp": Hp, "aligned": aligned}
    return tuple(layers), meta


# --------------------------------------------------------------------------
# Wrapper
# --------------------------------------------------------------------------
def _pick_batch_tile(bp):
    """Largest 8-multiple tile dividing bp (<=256); prefer >=2 grid steps so
    v7x's two TensorCores both get work via the 'parallel' axis."""
    cands = [d for d in range(_SUBLANE, min(bp, 256) + 1, _SUBLANE)
             if bp % d == 0]
    if not cands:
        return bp
    multi = [d for d in cands if bp // d >= 2]
    return max(multi) if multi else max(cands)


@functools.partial(jax.jit, static_argnames=("num_modalities", "hc", "aligned"))
def _fused_forward(x, layer_params, *, num_modalities, hc, aligned):
    B, F = x.shape
    L = len(layer_params)
    Hp = layer_params[0][0].shape[1]

    x = x.astype(jnp.float32)
    Bp = _round_up(max(B, 1), _SUBLANE)
    if Bp != B:                       # only pad to the 8-sublane multiple
        x = jnp.pad(x, ((0, Bp - B), (0, 0)))
    tb = _pick_batch_tile(Bp)

    kernel = _make_fused_kernel(L, num_modalities, hc, aligned)

    const = pl.Buffered(1)            # weights/affines never change across steps
    in_specs = [pl.BlockSpec((tb, F), lambda i: (i, 0))]
    flat_inputs = [x]
    for (w, a) in layer_params:
        if w.ndim == 2:
            in_specs.append(pl.BlockSpec(w.shape, lambda i: (0, 0),
                                         pipeline_mode=const))
        else:
            in_specs.append(pl.BlockSpec(w.shape, lambda i: (0, 0, 0),
                                         pipeline_mode=const))
        in_specs.append(pl.BlockSpec(a.shape, lambda i: (0, 0),
                                     pipeline_mode=const))
        flat_inputs.append(w)
        flat_inputs.append(a)

    # Explicit VMEM budget: resident params + double-buffered I/O tiles + slack.
    param_bytes = sum(int(w.size) * w.dtype.itemsize +
                      int(a.size) * a.dtype.itemsize for (w, a) in layer_params)
    io_bytes = 2 * (tb * F + tb * Hp) * 4
    scratch_bytes = 4 * tb * Hp * 4
    vmem_limit = int(min(96 << 20,
                         max(32 << 20,
                             1.25 * (param_bytes + io_bytes + scratch_bytes)
                             + (2 << 20))))

    # Cost estimate so XLA can overlap neighbouring ops with the custom call.
    if aligned:
        per_layer_flops = 2 * Bp * num_modalities * hc * hc
    else:
        per_layer_flops = 2 * Bp * Hp * Hp
    flops = 2 * Bp * F * Hp + per_layer_flops * (L - 1)
    bytes_accessed = int(Bp * F * 4 + param_bytes + Bp * Hp * 4)

    out = pl.pallas_call(
        kernel,
        out_shape=jax.ShapeDtypeStruct((Bp, Hp), jnp.float32),
        grid=(Bp // tb,),
        in_specs=in_specs,
        out_specs=pl.BlockSpec((tb, Hp), lambda i: (i, 0)),
        compiler_params=pltpu.CompilerParams(
            dimension_semantics=("parallel",),
            vmem_limit_bytes=vmem_limit),
        cost_estimate=pl.CostEstimate(flops=int(flops), transcendentals=0,
                                      bytes_accessed=bytes_accessed),
    )(*flat_inputs)
    return out[:B]


def intermediate_fusion_forward(x, fused_layers, meta):
    """Forward pass of IntermediateFusion (modality encoders; fusion() is
    abstract in the reference). Returns one (B, H) encoding per modality."""
    out = _fused_forward(x, fused_layers,
                         num_modalities=meta["num_modalities"],
                         hc=meta["Hc"], aligned=meta["aligned"])
    H, Hc, M = meta["hidden_size"], meta["Hc"], meta["num_modalities"]
    # With aligned layout (H >= 128) these slices are free lane-aligned views.
    return [out[:, m * Hc:m * Hc + H] for m in range(M)]


# --------------------------------------------------------------------------
# Deterministic parameter init (matches the Encoder layer shapes)
# --------------------------------------------------------------------------
def init_params(key, blocks, hidden_layer_size, hidden_layers):
    params = []
    for modality in blocks:
        layer_list = []
        current = len(modality)
        for _ in range(hidden_layers):
            key, kw, kb, kg, kbe = jax.random.split(key, 5)
            bound = 1.0 / jnp.sqrt(jnp.float32(current))
            w = jax.random.uniform(kw, (current, hidden_layer_size),
                                   minval=-bound, maxval=bound,
                                   dtype=jnp.float32)
            b = jax.random.uniform(kb, (hidden_layer_size,),
                                   minval=-bound, maxval=bound,
                                   dtype=jnp.float32)
            gamma = 1.0 + 0.1 * jax.random.normal(kg, (hidden_layer_size,),
                                                  dtype=jnp.float32)
            beta = 0.1 * jax.random.normal(kbe, (hidden_layer_size,),
                                           dtype=jnp.float32)
            layer_list.append({
                "w": w, "b": b, "gamma": gamma, "beta": beta,
                "running_mean": jnp.zeros((hidden_layer_size,), jnp.float32),
                "running_var": jnp.ones((hidden_layer_size,), jnp.float32),
            })
            current = hidden_layer_size
        params.append(layer_list)
    return params


def _reference_encodings(x, blocks, params, eps=1e-5):
    """Pure-JAX f32 eval-mode reference (Linear -> ReLU -> Dropout(id) -> BN)."""
    outs = []
    for ix, modality in enumerate(blocks):
        h = x[:, jnp.asarray(modality)]
        for p in params[ix]:
            h = jnp.maximum(h @ p["w"] + p["b"], 0.0)
            scale = p["gamma"] / jnp.sqrt(p["running_var"] + eps)
            h = h * scale + (p["beta"] - p["running_mean"] * scale)
        outs.append(h)
    return outs


if __name__ == "__main__":
    key = jax.random.PRNGKey(0)

    # --- Test 1: tiny H (block-diagonal hidden-layer path) -----------------
    B, F = 8, 16
    blocks = [[0, 1, 2, 3], [4, 5, 6, 7, 8, 9], [10, 11, 12, 13, 14, 15]]
    H, L = 32, 2

    key, kx = jax.random.split(key)
    x = jax.random.normal(kx, (B, F), dtype=jnp.float32)
    params = init_params(key, blocks, H, L)

    fused_layers, meta = prepare_fused_params(blocks, params,
                                              num_features=F, hidden_size=H)
    enc = intermediate_fusion_forward(x, fused_layers, meta)
    enc = [jax.block_until_ready(e) for e in enc]

    ref = _reference_encodings(x, blocks, params)
    for e, r, modality in zip(enc, ref, blocks):
        assert e.shape == (B, H)
        # bf16 weights/activations vs f32 reference -> loose tolerance expected.
        assert jnp.allclose(e, r, atol=3e-2, rtol=3e-2)

    # --- Test 2: H = 128 (lane-aligned per-modality GEMM path) -------------
    B2, F2 = 16, 16
    blocks2 = [[0, 1, 2, 3, 4, 5, 6, 7], [8, 9, 10, 11, 12, 13, 14, 15]]
    H2, L2 = 128, 2

    key, kx2 = jax.random.split(key)
    x2 = jax.random.normal(kx2, (B2, F2), dtype=jnp.float32)
    params2 = init_params(key, blocks2, H2, L2)

    fused_layers2, meta2 = prepare_fused_params(blocks2, params2,
                                                num_features=F2, hidden_size=H2)
    enc2 = intermediate_fusion_forward(x2, fused_layers2, meta2)
    enc2 = [jax.block_until_ready(e) for e in enc2]

    ref2 = _reference_encodings(x2, blocks2, params2)
    for e, r in zip(enc2, ref2):
        assert e.shape == (B2, H2)
        assert jnp.allclose(e, r, atol=3e-2, rtol=3e-2)

    print("KERNEL_OK")
</pallas_src>

<mosaic_0001>
module attributes {stable_mosaic.version = 11 : i64} {
  func.func @kernel(%arg0: i32, %arg1: memref<8x16xf32, #tpu.memory_space<vmem>>, %arg2: memref<16x128xbf16, #tpu.memory_space<vmem>>, %arg3: memref<8x128xf32, #tpu.memory_space<vmem>>, %arg4: memref<128x128xbf16, #tpu.memory_space<vmem>>, %arg5: memref<8x128xf32, #tpu.memory_space<vmem>>, %arg6: memref<8x128xf32, #tpu.memory_space<vmem>>) attributes {dimension_semantics = [#tpu.dimension_semantics<parallel>], iteration_bounds = array<i64: 1>, scalar_prefetch = 0 : i64, scratch_operands = 0 : i64, tpu.core_type = #tpu.core_type<tc>, window_params = [{transform_indices = @transform_0, window_bounds = array<i64: 8, 16>}, {pipeline_mode = #tpu.pipeline_mode<synchronous>, transform_indices = @transform_1, window_bounds = array<i64: 16, 128>}, {pipeline_mode = #tpu.pipeline_mode<synchronous>, transform_indices = @transform_2, window_bounds = array<i64: 8, 128>}, {pipeline_mode = #tpu.pipeline_mode<synchronous>, transform_indices = @transform_3, window_bounds = array<i64: 128, 128>}, {pipeline_mode = #tpu.pipeline_mode<synchronous>, transform_indices = @transform_4, window_bounds = array<i64: 8, 128>}, {transform_indices = @transform_5, window_bounds = array<i64: 8, 128>}]} {
    %c0 = arith.constant 0 : index
    %c0_0 = arith.constant 0 : index
    %0 = vector.load %arg1[%c0, %c0_0] : memref<8x16xf32, #tpu.memory_space<vmem>>, vector<8x16xf32>
    %c0_1 = arith.constant 0 : index
    %c0_2 = arith.constant 0 : index
    %1 = vector.load %arg3[%c0_1, %c0_2] : memref<8x128xf32, #tpu.memory_space<vmem>>, vector<8x128xf32>
    %2 = arith.truncf %0 : vector<8x16xf32> to vector<8x16xbf16>
    %c0_3 = arith.constant 0 : index
    %c0_4 = arith.constant 0 : index
    %3 = vector.load %arg2[%c0_3, %c0_4] : memref<16x128xbf16, #tpu.memory_space<vmem>>, vector<16x128xbf16>
    %cst = arith.constant dense<0.000000e+00> : vector<8x128xf32>
    %4 = tpu.matmul %2, %3, %cst {dimension_numbers = #tpu.dot_dimension_numbers<[1], [0], [0], [1], [0, 0, 1, 1], [], []>} : vector<8x16xbf16>, vector<16x128xbf16>, vector<8x128xf32> -> vector<8x128xf32>
    %5 = vector.extract_strided_slice %1 {offsets = [0, 0], sizes = [1, 128], strides = [1, 1]} : vector<8x128xf32> to vector<1x128xf32>
    %6 = vector.broadcast %5 : vector<1x128xf32> to vector<8x128xf32>
    %7 = arith.addf %4, %6 : vector<8x128xf32>
    %cst_5 = arith.constant 0.000000e+00 : f32
    %8 = vector.broadcast %cst_5 : f32 to vector<8x128xf32>
    %9 = arith.maximumf %7, %8 : vector<8x128xf32>
    %c0_6 = arith.constant 0 : index
    %c0_7 = arith.constant 0 : index
    %10 = vector.load %arg5[%c0_6, %c0_7] : memref<8x128xf32, #tpu.memory_space<vmem>>, vector<8x128xf32>
    %11 = arith.truncf %9 : vector<8x128xf32> to vector<8x128xbf16>
    %c0_8 = arith.constant 0 : index
    %c0_9 = arith.constant 0 : index
    %12 = vector.load %arg4[%c0_8, %c0_9] : memref<128x128xbf16, #tpu.memory_space<vmem>>, vector<128x128xbf16>
    %cst_10 = arith.constant dense<0.000000e+00> : vector<8x128xf32>
    %13 = tpu.matmul %11, %12, %cst_10 {dimension_numbers = #tpu.dot_dimension_numbers<[1], [0], [0], [1], [0, 0, 1, 1], [], []>} : vector<8x128xbf16>, vector<128x128xbf16>, vector<8x128xf32> -> vector<8x128xf32>
    %14 = vector.extract_strided_slice %10 {offsets = [0, 0], sizes = [1, 128], strides = [1, 1]} : vector<8x128xf32> to vector<1x128xf32>
    %15 = vector.broadcast %14 : vector<1x128xf32> to vector<8x128xf32>
    %16 = arith.addf %13, %15 : vector<8x128xf32>
    %cst_11 = arith.constant 0.000000e+00 : f32
    %17 = vector.broadcast %cst_11 : f32 to vector<8x128xf32>
    %18 = arith.maximumf %16, %17 : vector<8x128xf32>
    %19 = vector.extract_strided_slice %10 {offsets = [1, 0], sizes = [1, 128], strides = [1, 1]} : vector<8x128xf32> to vector<1x128xf32>
    %20 = vector.broadcast %19 : vector<1x128xf32> to vector<8x128xf32>
    %21 = arith.mulf %18, %20 : vector<8x128xf32>
    %22 = vector.extract_strided_slice %10 {offsets = [2, 0], sizes = [1, 128], strides = [1, 1]} : vector<8x128xf32> to vector<1x128xf32>
    %23 = vector.broadcast %22 : vector<1x128xf32> to vector<8x128xf32>
    %24 = arith.addf %21, %23 : vector<8x128xf32>
    %c0_12 = arith.constant 0 : index
    %c0_13 = arith.constant 0 : index
    %25 = vector.load %arg6[%c0_12, %c0_13] : memref<8x128xf32, #tpu.memory_space<vmem>>, vector<8x128xf32>
    tpu.vector_store %arg6[%c0_12, %c0_13], %24 {strides = array<i32>} : memref<8x128xf32, #tpu.memory_space<vmem>>, vector<8x128xf32>,
    return
  }
  func.func @transform_0(%arg0: i32) -> (i32, i32) {
    %c0_i32 = arith.constant 0 : i32
    %c0_i32_0 = arith.constant 0 : i32
    return %arg0, %c0_i32 : i32, i32
  }
  func.func @transform_1(%arg0: i32) -> (i32, i32) {
    %c0_i32 = arith.constant 0 : i32
    %c0_i32_0 = arith.constant 0 : i32
    %c0_i32_1 = arith.constant 0 : i32
    return %c0_i32, %c0_i32_0 : i32, i32
  }
  func.func @transform_2(%arg0: i32) -> (i32, i32) {
    %c0_i32 = arith.constant 0 : i32
    %c0_i32_0 = arith.constant 0 : i32
    %c0_i32_1 = arith.constant 0 : i32
    return %c0_i32, %c0_i32_0 : i32, i32
  }
  func.func @transform_3(%arg0: i32) -> (i32, i32) {
    %c0_i32 = arith.constant 0 : i32
    %c0_i32_0 = arith.constant 0 : i32
    %c0_i32_1 = arith.constant 0 : i32
    return %c0_i32, %c0_i32_0 : i32, i32
  }
  func.func @transform_4(%arg0: i32) -> (i32, i32) {
    %c0_i32 = arith.constant 0 : i32
    %c0_i32_0 = arith.constant 0 : i32
    %c0_i32_1 = arith.constant 0 : i32
    return %c0_i32, %c0_i32_0 : i32, i32
  }
  func.func @transform_5(%arg0: i32) -> (i32, i32) {
    %c0_i32 = arith.constant 0 : i32
    %c0_i32_0 = arith.constant 0 : i32
    return %arg0, %c0_i32 : i32, i32
  }
}

</mosaic_0001>

<llo_original>
// kernel: _fused_forward.1
$region0: #{_fused_forward.1}
  #allocation0 [shape = 'u32[]', space=smem, size = 0x4, offset = 0x4, fixed_abs, tag = 'smem constant byte address 0x4 - core index']
  #allocation1 [shape = 'u32[144,128]{1,0:T(1,128)}', space=vmem, size = 0x12000, scoped, tag = 'internal scratch']
  %s0 = inlined_call_operand.hbm [shape: f32[8,16], index: 0, kind: input, shape index: {}]
  %s1 = inlined_call_operand.hbm [shape: bf16[16,128], index: 1, kind: input, shape index: {}]
  %s2 = inlined_call_operand.hbm [shape: f32[8,128], index: 2, kind: input, shape index: {}]
  %s3 = inlined_call_operand.hbm [shape: bf16[128,128], index: 3, kind: input, shape index: {}]
  %s4 = inlined_call_operand.hbm [shape: f32[8,128], index: 4, kind: input, shape index: {}]
  %s5 = inlined_call_operand.hbm [shape: f32[8,128], index: 5, kind: output, shape index: {}]
  %s6 = sld [smem:[#allocation0]]
  $region50: #{_fused_forward.1} parent=0
    _
  %s8 = ssub.s32 1, %s6
  %s9 = scalar_select 0, %s8, %s6
  $region1: #{_fused_forward.1} parent=0
    #allocation2 [shape = 'u8[4096]{0}', space=vmem, size = 0x1000, scoped, tag = 'input window, operand 0, single buffered']
    #allocation3 [shape = 's32[1]{0}', space=sflag, size = 0x4, scoped, tag = 'scoped memory for _fused_forward.1']
    #allocation4 [shape = 's32[1]{0}', space=sflag, size = 0x4, scoped, tag = 'scoped memory for _fused_forward.1']
    #allocation5 [shape = 'u8[4096]{0}', space=vmem, size = 0x1000, scoped, tag = 'input window, operand 1, single buffered']
    #allocation6 [shape = 's32[1]{0}', space=sflag, size = 0x4, scoped, tag = 'scoped memory for _fused_forward.1']
    #allocation7 [shape = 'u8[4096]{0}', space=vmem, size = 0x1000, scoped, tag = 'input window, operand 2, single buffered']
    #allocation8 [shape = 'u8[32768]{0}', space=vmem, size = 0x8000, scoped, tag = 'input window, operand 3, single buffered']
    #allocation9 [shape = 's32[1]{0}', space=sflag, size = 0x4, scoped, tag = 'scoped memory for _fused_forward.1']
    #allocation10 [shape = 'u8[4096]{0}', space=vmem, size = 0x1000, scoped, tag = 'input window, operand 4, single buffered']
    #allocation11 [shape = 'u8[4096]{0}', space=vmem, size = 0x1000, scoped, tag = 'output window, operand 0, single buffered']
    %10 = vsyncpa [#allocation3], 0
    %11 = vsyncpa [#allocation6], 0
    %12 = vsyncpa [#allocation9], 0
    %13 = vsyncpa [#allocation4], 0
    // Predicated region
    $region2: #{_fused_forward.1} parent=1 // pred_check
      _
    $region3: #{_fused_forward.1} parent=1 // pred_check_branch
      %15 = sbr.rel (0) target = $region5
    $region4: #{_fused_forward.1} parent=1 // pred_region
      %s17 = ssub.s32 128, 128
      %18 = vsyncadd [#allocation3], %s17
      %s20 = sshll.u32 [#allocation2], 4
      %s21 = int_to_ptr.vmem [resolvable:$true] %s20
      %23 = dma.hbm_to_vmem [thread:$0]  %s0, 128, %s21, [#allocation3]
    $region5: #{_fused_forward.1} parent=1 // pred_fallthru
      _
    // Predicated region
    $region6: #{_fused_forward.1} parent=1 // pred_check
      _
    $region7: #{_fused_forward.1} parent=1 // pred_check_branch
      %25 = sbr.rel (0) target = $region9
    $region8: #{_fused_forward.1} parent=1 // pred_region
      %s27 = ssub.s32 128, 128
      %28 = vsyncadd [#allocation6], %s27
      %s29 = sshll.u32 [#allocation5], 4
      %s30 = int_to_ptr.vmem [resolvable:$true] %s29
      %35 = dma.hbm_to_vmem [thread:$0]  %s1, 128, %s30, [#allocation6], 64, 64, 4
    $region9: #{_fused_forward.1} parent=1 // pred_fallthru
      _
    // Predicated region
    $region10: #{_fused_forward.1} parent=1 // pred_check
      _
    $region11: #{_fused_forward.1} parent=1 // pred_check_branch
      %37 = sbr.rel (0) target = $region13
    $region12: #{_fused_forward.1} parent=1 // pred_region
      %s39 = ssub.s32 128, 128
      %40 = vsyncadd [#allocation6], %s39
      %s42 = sshll.u32 [#allocation7], 4
      %s43 = int_to_ptr.vmem [resolvable:$true] %s42
      %45 = dma.hbm_to_vmem [thread:$0]  %s2, 128, %s43, [#allocation6]
    $region13: #{_fused_forward.1} parent=1 // pred_fallthru
      _
    // Predicated region
    $region14: #{_fused_forward.1} parent=1 // pred_check
      _
    $region15: #{_fused_forward.1} parent=1 // pred_check_branch
      %47 = sbr.rel (0) target = $region17
    $region16: #{_fused_forward.1} parent=1 // pred_region
      %s49 = ssub.s32 1024, 1024
      %50 = vsyncadd [#allocation9], %s49
      %s51 = sshll.u32 [#allocation8], 4
      %s52 = int_to_ptr.vmem [resolvable:$true] %s51
      %57 = dma.hbm_to_vmem [thread:$0]  %s3, 1024, %s52, [#allocation9], 64, 64, 4
    $region17: #{_fused_forward.1} parent=1 // pred_fallthru
      _
    // Predicated region
    $region18: #{_fused_forward.1} parent=1 // pred_check
      _
    $region19: #{_fused_forward.1} parent=1 // pred_check_branch
      %59 = sbr.rel (0) target = $region21
    $region20: #{_fused_forward.1} parent=1 // pred_region
      %s61 = ssub.s32 128, 128
      %62 = vsyncadd [#allocation9], %s61
      %s64 = sshll.u32 [#allocation10], 4
      %s65 = int_to_ptr.vmem [resolvable:$true] %s64
      %67 = dma.hbm_to_vmem [thread:$0]  %s4, 128, %s65, [#allocation9]
    $region21: #{_fused_forward.1} parent=1 // pred_fallthru
      _
    // Predicated region
    $region22: #{_fused_forward.1} parent=1 // pred_check
      _
    $region23: #{_fused_forward.1} parent=1 // pred_check_branch
      %69 = sbr.rel (0) target = $region25
    $region24: #{_fused_forward.1} parent=1 // pred_region
      %70 = dma.done [#allocation3], 128
    $region25: #{_fused_forward.1} parent=1 // pred_fallthru
      _
    // Predicated region
    $region26: #{_fused_forward.1} parent=1 // pred_check
      _
    $region27: #{_fused_forward.1} parent=1 // pred_check_branch
      %72 = sbr.rel (0) target = $region29
    $region28: #{_fused_forward.1} parent=1 // pred_region
      %73 = dma.done [#allocation6], 128
    $region29: #{_fused_forward.1} parent=1 // pred_fallthru
      _
    // Predicated region
    $region30: #{_fused_forward.1} parent=1 // pred_check
      _
    $region31: #{_fused_forward.1} parent=1 // pred_check_branch
      %75 = sbr.rel (0) target = $region33
    $region32: #{_fused_forward.1} parent=1 // pred_region
      %76 = dma.done [#allocation6], 128
    $region33: #{_fused_forward.1} parent=1 // pred_fallthru
      _
    // Predicated region
    $region34: #{_fused_forward.1} parent=1 // pred_check
      _
    $region35: #{_fused_forward.1} parent=1 // pred_check_branch
      %78 = sbr.rel (0) target = $region37
    $region36: #{_fused_forward.1} parent=1 // pred_region
      %79 = dma.done [#allocation9], 1024
    $region37: #{_fused_forward.1} parent=1 // pred_fallthru
      _
    // Predicated region
    $region38: #{_fused_forward.1} parent=1 // pred_check
      _
    $region39: #{_fused_forward.1} parent=1 // pred_check_branch
      %81 = sbr.rel (0) target = $region41
    $region40: #{_fused_forward.1} parent=1 // pred_region
      %82 = dma.done [#allocation9], 128
    $region41: #{_fused_forward.1} parent=1 // pred_fallthru
      _
    %v84 = vld [vmem:[#allocation2] sm:$0xff]
    %v85 = vld [vmem:[#allocation7] sm:$0xff]
    %v86 = vpack.c.bf16 %v84, %v84
    %v87 = vld [vmem:[#allocation5] sm:$0xf]
    %v88 = vld [vmem:[#allocation5 + $0x4] sm:$0xf]
    %v89 = vlaneseq
    %v90 = vshrl.u32 %v89, 7
    %v91 = vsub.s32 0, %v90
    %v92 = vrot.slane %v85, %v91
    %v95 = vunpack.c.l.b16 %v87
    %v96 = vunpack.c.l.b16 %v88
    %v97 = vpack.c.b16 %v96, %v95
    %vm99 = vcmask 130048
    %v101 = vsel %vm99, %v86, 0
    %103 = vmatprep.subr.bf16.mxu0 0
    %104 = vmatpush1.bf16.msra.mxu0 0
    %105 = vmatprep.subr.bf16.mxu0 0
    %106 = vmatpush1.bf16.msra.mxu0 0
    %107 = vmatprep.subr.bf16.mxu0 0
    %108 = vmatpush1.bf16.msra.mxu0 0
    %109 = vmatprep.subr.bf16.mxu0 0
    %110 = vmatpush1.bf16.msra.mxu0 0
    %111 = vmatprep.subr.bf16.mxu0 0
    %112 = vmatpush1.bf16.msra.mxu0 0
    %113 = vmatprep.subr.bf16.mxu0 0
    %114 = vmatpush1.bf16.msra.mxu0 0
    %115 = vmatprep.subr.bf16.mxu0 0
    %116 = vmatpush1.bf16.msra.mxu0 0
    %117 = vmatprep.subr.bf16.mxu0 0
    %118 = vmatpush1.bf16.msra.mxu0 %v97
    %119 = vmatprep.subr.bf16.mxu0 0
    %120 = vmatpush2.bf16.msra.mxu0 0
    %121 = vmatprep.subr.bf16.mxu0 0
    %122 = vmatpush2.bf16.msra.mxu0 0
    %123 = vmatprep.subr.bf16.mxu0 0
    %124 = vmatpush2.bf16.msra.mxu0 0
    %125 = vmatprep.subr.bf16.mxu0 0
    %126 = vmatpush2.bf16.msra.mxu0 0
    %127 = vmatprep.subr.bf16.mxu0 0
    %128 = vmatpush2.bf16.msra.mxu0 0
    %129 = vmatprep.subr.bf16.mxu0 0
    %130 = vmatpush2.bf16.msra.mxu0 0
    %131 = vmatprep.subr.bf16.mxu0 0
    %132 = vmatpush2.bf16.msra.mxu0 0
    %133 = vmatprep.subr.bf16.mxu0 0
    %134 = vmatpush2.bf16.msra.mxu0 0
    %135 = vmatprep.mubr.bf16.mxu0 0
    %136 = vmatmul.mubr.bf16.gmra.mxu0 %v101
    %v137 = vpop.f32.mrf.mxu0
    %v138 = vadd.f32 %v92, %v137
    %v139 = vpop.f32.mrf.mxu0
    %v140 = vpop.f32.mrf.mxu0
    %v141 = vpop.f32.mrf.mxu0
    %142 = vdwg.mxu0
    %v143 = vmax.f32 %v138, 0.0
    %v144 = vld [vmem:[#allocation10] sm:$0xff]
    %v145 = vpack.c.bf16 %v143, %v143
    %v146 = vld [vmem:[#allocation8] sm:$0xf]
    %v147 = vld [vmem:[#allocation8 + $0x4] sm:$0xf]
    %v148 = vld [vmem:[#allocation8 + $0x8] sm:$0xf]
    %v149 = vld [vmem:[#allocation8 + $0xc] sm:$0xf]
    %v150 = vld [vmem:[#allocation8 + $0x10] sm:$0xf]
    %v151 = vld [vmem:[#allocation8 + $0x14] sm:$0xf]
    %v152 = vld [vmem:[#allocation8 + $0x18] sm:$0xf]
    %v153 = vld [vmem:[#allocation8 + $0x1c] sm:$0xf]
    %v154 = vld [vmem:[#allocation8 + $0x20] sm:$0xf]
    %v155 = vld [vmem:[#allocation8 + $0x24] sm:$0xf]
    %v156 = vld [vmem:[#allocation8 + $0x28] sm:$0xf]
    %v157 = vld [vmem:[#allocation8 + $0x2c] sm:$0xf]
    %v158 = vld [vmem:[#allocation8 + $0x30] sm:$0xf]
    %v159 = vld [vmem:[#allocation8 + $0x34] sm:$0xf]
    %v160 = vld [vmem:[#allocation8 + $0x38] sm:$0xf]
    %v161 = vld [vmem:[#allocation8 + $0x3c] sm:$0xf]
    %v162 = vlaneseq
    %v163 = vshrl.u32 %v162, 7
    %v164 = vsub.s32 0, %v163
    %v165 = vrot.slane %v144, %v164
    %v182 = vunpack.c.l.b16 %v146
    %v183 = vunpack.c.l.b16 %v147
    %v184 = vunpack.c.l.b16 %v148
    %v185 = vunpack.c.l.b16 %v149
    %v186 = vunpack.c.l.b16 %v150
    %v187 = vunpack.c.l.b16 %v151
    %v188 = vunpack.c.l.b16 %v152
    %v189 = vunpack.c.l.b16 %v153
    %v190 = vunpack.c.l.b16 %v154
    %v191 = vunpack.c.l.b16 %v155
    %v192 = vunpack.c.l.b16 %v156
    %v193 = vunpack.c.l.b16 %v157
    %v194 = vunpack.c.l.b16 %v158
    %v195 = vunpack.c.l.b16 %v159
    %v196 = vunpack.c.l.b16 %v160
    %v197 = vunpack.c.l.b16 %v161
    %v198 = vpack.c.b16 %v183, %v182
    %v199 = vpack.c.b16 %v185, %v184
    %v200 = vpack.c.b16 %v187, %v186
    %v201 = vpack.c.b16 %v189, %v188
    %v202 = vpack.c.b16 %v191, %v190
    %v203 = vpack.c.b16 %v193, %v192
    %v204 = vpack.c.b16 %v195, %v194
    %v205 = vpack.c.b16 %v197, %v196
    %214 = vmatprep.subr.bf16.mxu0 0
    %215 = vmatpush1.bf16.msra.mxu0 %v205
    %216 = vmatprep.subr.bf16.mxu0 0
    %217 = vmatpush1.bf16.msra.mxu0 %v204
    %218 = vmatprep.subr.bf16.mxu0 0
    %219 = vmatpush1.bf16.msra.mxu0 %v203
    %220 = vmatprep.subr.bf16.mxu0 0
    %221 = vmatpush1.bf16.msra.mxu0 %v202
    %222 = vmatprep.subr.bf16.mxu0 0
    %223 = vmatpush1.bf16.msra.mxu0 %v201
    %224 = vmatprep.subr.bf16.mxu0 0
    %225 = vmatpush1.bf16.msra.mxu0 %v200
    %226 = vmatprep.subr.bf16.mxu0 0
    %227 = vmatpush1.bf16.msra.mxu0 %v199
    %228 = vmatprep.subr.bf16.mxu0 0
    %229 = vmatpush1.bf16.msra.mxu0 %v198
    %230 = vmatprep.subr.bf16.mxu0 0
    %231 = vmatpush2.bf16.msra.mxu0 0
    %232 = vmatprep.subr.bf16.mxu0 0
    %233 = vmatpush2.bf16.msra.mxu0 0
    %234 = vmatprep.subr.bf16.mxu0 0
    %235 = vmatpush2.bf16.msra.mxu0 0
    %236 = vmatprep.subr.bf16.mxu0 0
    %237 = vmatpush2.bf16.msra.mxu0 0
    %238 = vmatprep.subr.bf16.mxu0 0
    %239 = vmatpush2.bf16.msra.mxu0 0
    %240 = vmatprep.subr.bf16.mxu0 0
    %241 = vmatpush2.bf16.msra.mxu0 0
    %242 = vmatprep.subr.bf16.mxu0 0
    %243 = vmatpush2.bf16.msra.mxu0 0
    %244 = vmatprep.subr.bf16.mxu0 0
    %245 = vmatpush2.bf16.msra.mxu0 0
    %246 = vmatprep.mubr.bf16.mxu0 0
    %247 = vmatmul.mubr.bf16.gmra.mxu0 %v145
    %v248 = vpop.f32.mrf.mxu0
    %v249 = vadd.f32 %v165, %v248
    %v250 = vpop.f32.mrf.mxu0
    %v251 = vpop.f32.mrf.mxu0
    %v252 = vpop.f32.mrf.mxu0
    %253 = vdwg.mxu0
    %v254 = vmax.f32 %v249, 0.0
    %v255 = vlaneseq
    %v256 = vshrl.u32 %v255, 7
    %v257 = vsub.s32 1, %v256
    %v258 = vrot.slane %v144, %v257
    %v259 = vmul.f32 %v254, %v258
    %v260 = vlaneseq
    %v261 = vshrl.u32 %v260, 7
    %v262 = vsub.s32 2, %v261
    %v263 = vrot.slane %v144, %v262
    %v264 = vadd.f32 %v259, %v263
    %265 = vst [vmem:[#allocation11] sm:$0xff] %v264
    // Predicated region
    $region42: #{_fused_forward.1} parent=1 // pred_check
      _
    $region43: #{_fused_forward.1} parent=1 // pred_check_branch
      %267 = sbr.rel (0) target = $region45
    $region44: #{_fused_forward.1} parent=1 // pred_region
      %s269 = ssub.s32 128, 128
      %270 = vsyncadd [#allocation4], %s269
      %s272 = sshll.u32 [#allocation11], 4
      %s273 = int_to_ptr.vmem [resolvable:$true] %s272
      %275 = dma.vmem_to_hbm [thread:$0]  %s273, 128, %s5, [#allocation4]
    $region45: #{_fused_forward.1} parent=1 // pred_fallthru
      _
    // Predicated region
    $region46: #{_fused_forward.1} parent=1 // pred_check
      _
    $region47: #{_fused_forward.1} parent=1 // pred_check_branch
      %277 = sbr.rel (0) target = $region49
    $region48: #{_fused_forward.1} parent=1 // pred_region
      %278 = dma.done [#allocation4], 128
    $region49: #{_fused_forward.1} parent=1 // pred_fallthru
      _
    %279 = vsyncpa [#allocation3], 1
    %280 = vsyncpa [#allocation6], 1
    %281 = vsyncpa [#allocation9], 1
    %282 = vsyncpa [#allocation4], 1

</llo_original>
